<compile_context>
chip_gen: v7x
topology: tpu7x:2x2x1
jax: 0.10.0
libtpu: 0.0.40
codegen_flags: <defaults>
</compile_context>

<pallas_src>
import jax
import jax.numpy as jnp
from jax.experimental import pallas as pl
from jax.experimental.pallas import tpu as pltpu


def _round_up(x, m):
    return ((x + m - 1) // m) * m


def _make_patch_embed_kernel(e_true):
    def kernel(x_ref, w_ref, b_ref, o_ref):
        # x_ref: (tm, K) bf16 pipelined tile; w_ref: (K, Ep) bf16 VMEM resident;
        # b_ref: (1, E) f32 VMEM resident; o_ref: (tm, E) output tile.
        acc = jnp.dot(x_ref[...], w_ref[...], preferred_element_type=jnp.float32)
        if acc.shape[-1] != e_true:
            # Static lane-slice: drop the MXU padding lanes before bias/store.
            acc = acc[:, :e_true]
        # NOTE: the final partial M block relies on Pallas masking the output
        # store; rows past M are garbage fed through the MXU and discarded.
        o_ref[...] = (acc + b_ref[...]).astype(o_ref.dtype)
    return kernel


def _vmem_budget_bytes():
    """Per-chip VMEM budget: half of physical, capped at 64 MiB."""
    try:
        cap = pltpu.get_tpu_info().vmem_capacity_bytes
    except Exception:
        cap = 64 << 20                    # conservative fallback
    return int(min(cap // 2, 64 << 20))


def _choose_tile_m(M, K, E, Ep, x_bytes, out_bytes, budget):
    """Largest sublane-aligned M tile fitting `budget` bytes of VMEM."""
    k_lane = _round_up(K, 128)            # x tile is lane-padded in VMEM
    e_lane = _round_up(E, 128)            # out tile is lane-padded in VMEM
    resident = k_lane * Ep * x_bytes + e_lane * 4       # weight + bias, 1 copy
    if resident > budget // 2:
        # TODO(synk): add a K grid axis + f32 VMEM accumulator (init/finalize
        # via pl.when, axis marked "arbitrary") for configs whose resident
        # weight does not comfortably fit VMEM.
        raise ValueError(
            f"resident weight ({resident} B) exceeds half the VMEM budget "
            f"({budget} B); K-split accumulator path not implemented")
    per_row = 2 * (k_lane * x_bytes + e_lane * out_bytes)  # dbl-buffered tiles
    cap = (budget - resident) // per_row
    tm_cap = 2048 if budget >= (48 << 20) else 1024        # bigger tiles on 128 MiB parts
    tm = min(tm_cap, cap, M)
    # Keep >=4 grid steps (>=2 per TensorCore on v7x) only when the per-step
    # activation tile is big enough for pipelining / the megacore split to
    # pay for the per-step overhead; tiny demo problems stay single-step.
    if tm * k_lane * x_bytes >= (512 << 10):
        tm = min(tm, _round_up(pl.cdiv(M, 4), 16))
    if tm >= M:
        return M                           # single block == full dim, any M ok
    return max(16, (tm // 16) * 16)        # bf16 sublane-pair aligned tiling


def patch_embed(x, weight, bias, patch_size, *,
                compute_dtype=jnp.bfloat16, out_dtype=None):
    """ESRT PatchEmbed forward.

    x: (B, C, H, W); weight: (E, C, ph, pw); bias: (E,).
    Returns (B, num_patches, E) in `out_dtype` (default: x.dtype).
    """
    B, C, H, W = x.shape
    E = weight.shape[0]
    ph, pw = patch_size
    assert H % ph == 0 and W % pw == 0, "image size must be divisible by patch"
    Hp, Wp = H // ph, W // pw
    num_patches = Hp * Wp
    K = C * ph * pw
    M = B * num_patches
    out_dtype = x.dtype if out_dtype is None else out_dtype

    # Patchify: flatten order (c, kh, kw) matches the conv-weight flatten order.
    # allow_input_fusion (activation operand only) lets XLA fold this
    # transpose/cast chain into the custom call's operand fetch.
    # TODO(synk): if profiling shows this still materializes a separate HBM
    # pass, move the regroup in-kernel (grid over (B, Hp row-bands), x blocked
    # in native NCHW, (Wp, C*ph*pw) regroup done in VMEM).
    xp = x.reshape(B, C, Hp, ph, Wp, pw)
    xp = jnp.transpose(xp, (0, 2, 4, 1, 3, 5))           # (B, Hp, Wp, C, ph, pw)
    xp = xp.reshape(M, K).astype(compute_dtype)          # (M, K)

    # Weight padded to a lane-dense (multiple-of-128) width for the MXU;
    # bias stays unpadded (added after the in-kernel lane-slice).
    Ep = _round_up(E, 128)
    w_mat = weight.reshape(E, K).T.astype(compute_dtype)  # (K, E)
    if Ep != E:
        w_mat = jnp.pad(w_mat, ((0, 0), (0, Ep - E)))     # (K, Ep)
    b_mat = bias.reshape(1, E).astype(jnp.float32)        # (1, E)

    x_bytes = jnp.dtype(compute_dtype).itemsize
    out_bytes = jnp.dtype(out_dtype).itemsize
    budget = _vmem_budget_bytes()
    tm = _choose_tile_m(M, K, E, Ep, x_bytes, out_bytes, budget)
    grid = (pl.cdiv(M, tm),)

    cost = pl.CostEstimate(
        flops=2 * M * K * Ep,
        transcendentals=0,
        bytes_accessed=(M * K * x_bytes + K * Ep * x_bytes
                        + M * E * out_bytes + E * 4),
    )

    out = pl.pallas_call(
        _make_patch_embed_kernel(E),
        out_shape=jax.ShapeDtypeStruct((M, E), out_dtype),
        grid_spec=pltpu.PrefetchScalarGridSpec(
            num_scalar_prefetch=0,
            grid=grid,
            in_specs=[
                # Per-step activation tile, pipelined (double-buffered).
                pl.BlockSpec((tm, K), lambda i: (i, 0)),
                # Grid-constant weight / bias: whole-array VMEM residents
                # (single copy, no pointless double-buffering).
                pl.BlockSpec(memory_space=pltpu.MemorySpace.VMEM),
                pl.BlockSpec(memory_space=pltpu.MemorySpace.VMEM),
            ],
            # True-width output: no padded writes, no post-kernel slice pass.
            out_specs=pl.BlockSpec((tm, E), lambda i: (i, 0)),
        ),
        compiler_params=pltpu.CompilerParams(
            dimension_semantics=("parallel",),
            # Only the activation operand may fuse its producer (patchify
            # transpose / cast); weight & bias stay as clean bulk DMAs.
            allow_input_fusion=[True, False, False],
            vmem_limit_bytes=budget,
        ),
        cost_estimate=cost,
    )(xp, w_mat, b_mat)

    return out.reshape(B, num_patches, E)


if __name__ == "__main__":
    # Small shapes consistent with the module: img_size=16, patch_size=2,
    # in_chans=4, embed_dim=32, batch=2.
    B, C, H, W = 2, 4, 16, 16
    patch = (2, 2)
    E = 32

    key = jax.random.PRNGKey(0)
    kx, kw, kb = jax.random.split(key, 3)
    x = jax.random.normal(kx, (B, C, H, W), dtype=jnp.float32)
    weight = jax.random.normal(kw, (E, C, patch[0], patch[1]), dtype=jnp.float32) * 0.02
    bias = jax.random.normal(kb, (E,), dtype=jnp.float32) * 0.02

    out = patch_embed(x, weight, bias, patch)
    out = jax.block_until_ready(out)

    # Reference: the stride==kernel conv, evaluated with the same bf16-rounded
    # inputs the kernel consumes (both paths accumulate in f32).
    x_q = x.astype(jnp.bfloat16).astype(jnp.float32)
    w_q = weight.astype(jnp.bfloat16).astype(jnp.float32)
    ref = jax.lax.conv_general_dilated(
        x_q, w_q, window_strides=patch, padding="VALID",
        dimension_numbers=("NCHW", "OIHW", "NCHW"),
        precision=jax.lax.Precision.HIGHEST)
    ref = ref + bias[None, :, None, None]
    ref = ref.reshape(B, E, -1).transpose(0, 2, 1)

    assert out.shape == (B, (H // patch[0]) * (W // patch[1]), E)
    assert jnp.allclose(out, ref, atol=2e-3, rtol=2e-3), (
        float(jnp.max(jnp.abs(out - ref))))

    print("KERNEL_OK")
</pallas_src>

<mosaic_0001>
module attributes {stable_mosaic.version = 11 : i64} {
  func.func @kernel(%arg0: i32, %arg1: memref<128x16xbf16, #tpu.memory_space<vmem>>, %arg2: memref<16x128xbf16, #tpu.memory_space<vmem>>, %arg3: memref<1x32xf32, #tpu.memory_space<vmem>>, %arg4: memref<128x32xf32, #tpu.memory_space<vmem>>) attributes {dimension_semantics = [#tpu.dimension_semantics<parallel>], iteration_bounds = array<i64: 1>, scalar_prefetch = 0 : i64, scratch_operands = 0 : i64, tpu.core_type = #tpu.core_type<tc>, window_params = [{transform_indices = @transform_0, window_bounds = array<i64: 128, 16>}, {pipeline_mode = #tpu.pipeline_mode<synchronous>, transform_indices = @transform_1, window_bounds = array<i64: 16, 128>}, {pipeline_mode = #tpu.pipeline_mode<synchronous>, transform_indices = @transform_2, window_bounds = array<i64: 1, 32>}, {transform_indices = @transform_3, window_bounds = array<i64: 128, 32>}]} {
    %c0 = arith.constant 0 : index
    %c0_0 = arith.constant 0 : index
    %0 = vector.load %arg1[%c0, %c0_0] : memref<128x16xbf16, #tpu.memory_space<vmem>>, vector<128x16xbf16>
    %c0_1 = arith.constant 0 : index
    %c0_2 = arith.constant 0 : index
    %1 = vector.load %arg2[%c0_1, %c0_2] : memref<16x128xbf16, #tpu.memory_space<vmem>>, vector<16x128xbf16>
    %cst = arith.constant dense<0.000000e+00> : vector<128x128xf32>
    %2 = tpu.matmul %0, %1, %cst {dimension_numbers = #tpu.dot_dimension_numbers<[1], [0], [0], [1], [0, 0, 1, 1], [], []>} : vector<128x16xbf16>, vector<16x128xbf16>, vector<128x128xf32> -> vector<128x128xf32>
    %3 = vector.extract_strided_slice %2 {offsets = [0, 0], sizes = [128, 32], strides = [1, 1]} : vector<128x128xf32> to vector<128x32xf32>
    %c0_3 = arith.constant 0 : index
    %c0_4 = arith.constant 0 : index
    %4 = vector.load %arg3[%c0_3, %c0_4] : memref<1x32xf32, #tpu.memory_space<vmem>>, vector<1x32xf32>
    %5 = vector.broadcast %4 : vector<1x32xf32> to vector<128x32xf32>
    %6 = arith.addf %3, %5 : vector<128x32xf32>
    %c0_5 = arith.constant 0 : index
    %c0_6 = arith.constant 0 : index
    %7 = vector.load %arg4[%c0_5, %c0_6] : memref<128x32xf32, #tpu.memory_space<vmem>>, vector<128x32xf32>
    tpu.vector_store %arg4[%c0_5, %c0_6], %6 {strides = array<i32>} : memref<128x32xf32, #tpu.memory_space<vmem>>, vector<128x32xf32>,
    return
  }
  func.func @transform_0(%arg0: i32) -> (i32, i32) {
    %c0_i32 = arith.constant 0 : i32
    %c0_i32_0 = arith.constant 0 : i32
    return %arg0, %c0_i32 : i32, i32
  }
  func.func @transform_1(%arg0: i32) -> (i32, i32) {
    %c0_i32 = arith.constant 0 : i32
    %c0_i32_0 = arith.constant 0 : i32
    %c0_i32_1 = arith.constant 0 : i32
    return %c0_i32, %c0_i32_0 : i32, i32
  }
  func.func @transform_2(%arg0: i32) -> (i32, i32) {
    %c0_i32 = arith.constant 0 : i32
    %c0_i32_0 = arith.constant 0 : i32
    %c0_i32_1 = arith.constant 0 : i32
    return %c0_i32, %c0_i32_0 : i32, i32
  }
  func.func @transform_3(%arg0: i32) -> (i32, i32) {
    %c0_i32 = arith.constant 0 : i32
    %c0_i32_0 = arith.constant 0 : i32
    return %arg0, %c0_i32 : i32, i32
  }
}

</mosaic_0001>

<llo_original>
// kernel: tpu_custom_call.1
$region0: #{tpu_custom_call.1}
  #allocation0 [shape = 'u32[]', space=smem, size = 0x4, offset = 0x4, fixed_abs, tag = 'smem constant byte address 0x4 - core index']
  #allocation1 [shape = 'u32[144,128]{1,0:T(1,128)}', space=vmem, size = 0x12000, scoped, tag = 'internal scratch']
  %s0 = inlined_call_operand.vmem [shape: bf16[128,16], index: 0, kind: input, shape index: {}]
  %s1 = inlined_call_operand.vmem [shape: bf16[16,128], index: 1, kind: input, shape index: {}]
  %s2 = inlined_call_operand.vmem [shape: f32[1,32], index: 2, kind: input, shape index: {}]
  %s3 = inlined_call_operand.vmem [shape: f32[128,32], index: 3, kind: output, shape index: {}]
  %s4 = sld [smem:[#allocation0]]
  $region22: #{tpu_custom_call.1} parent=0
    _
  %s6 = ssub.s32 1, %s4
  %s7 = scalar_select 0, %s6, %s4
  // Predicated region
  $region2: #{tpu_custom_call.1} parent=0 // pred_check
    _
  $region3: #{tpu_custom_call.1} parent=0 // pred_check_branch
    %9 = sbr.rel (0) target = $region5
  $region4: #{tpu_custom_call.1} parent=0 // pred_region
    _
  $region5: #{tpu_custom_call.1} parent=0 // pred_fallthru
    _
  // Predicated region
  $region6: #{tpu_custom_call.1} parent=0 // pred_check
    _
  $region7: #{tpu_custom_call.1} parent=0 // pred_check_branch
    %11 = sbr.rel (0) target = $region9
  $region8: #{tpu_custom_call.1} parent=0 // pred_region
    _
  $region9: #{tpu_custom_call.1} parent=0 // pred_fallthru
    _
  // Predicated region
  $region10: #{tpu_custom_call.1} parent=0 // pred_check
    _
  $region11: #{tpu_custom_call.1} parent=0 // pred_check_branch
    %13 = sbr.rel (0) target = $region13
  $region12: #{tpu_custom_call.1} parent=0 // pred_region
    _
  $region13: #{tpu_custom_call.1} parent=0 // pred_fallthru
    _
  %v15 = vld [vmem:[%s0] sm:$0xf]
  %v16 = vld [vmem:[%s0 + $0x4] sm:$0xf]
  %v17 = vld [vmem:[%s0 + $0x8] sm:$0xf]
  %v18 = vld [vmem:[%s0 + $0xc] sm:$0xf]
  %v19 = vld [vmem:[%s0 + $0x10] sm:$0xf]
  %v20 = vld [vmem:[%s0 + $0x14] sm:$0xf]
  %v21 = vld [vmem:[%s0 + $0x18] sm:$0xf]
  %v22 = vld [vmem:[%s0 + $0x1c] sm:$0xf]
  %v23 = vld [vmem:[%s0 + $0x20] sm:$0xf]
  %v24 = vld [vmem:[%s0 + $0x24] sm:$0xf]
  %v25 = vld [vmem:[%s0 + $0x28] sm:$0xf]
  %v26 = vld [vmem:[%s0 + $0x2c] sm:$0xf]
  %v27 = vld [vmem:[%s0 + $0x30] sm:$0xf]
  %v28 = vld [vmem:[%s0 + $0x34] sm:$0xf]
  %v29 = vld [vmem:[%s0 + $0x38] sm:$0xf]
  %v30 = vld [vmem:[%s0 + $0x3c] sm:$0xf]
  %v31 = vld [vmem:[%s1] sm:$0xf]
  %v32 = vld [vmem:[%s1 + $0x4] sm:$0xf]
  %v49 = vunpack.c.l.b16 %v15
  %v50 = vunpack.c.l.b16 %v16
  %v51 = vunpack.c.l.b16 %v17
  %v52 = vunpack.c.l.b16 %v18
  %v53 = vunpack.c.l.b16 %v19
  %v54 = vunpack.c.l.b16 %v20
  %v55 = vunpack.c.l.b16 %v21
  %v56 = vunpack.c.l.b16 %v22
  %v57 = vunpack.c.l.b16 %v23
  %v58 = vunpack.c.l.b16 %v24
  %v59 = vunpack.c.l.b16 %v25
  %v60 = vunpack.c.l.b16 %v26
  %v61 = vunpack.c.l.b16 %v27
  %v62 = vunpack.c.l.b16 %v28
  %v63 = vunpack.c.l.b16 %v29
  %v64 = vunpack.c.l.b16 %v30
  %v65 = vpack.c.b16 %v50, %v49
  %v66 = vpack.c.b16 %v52, %v51
  %v67 = vpack.c.b16 %v54, %v53
  %v68 = vpack.c.b16 %v56, %v55
  %v69 = vpack.c.b16 %v58, %v57
  %v70 = vpack.c.b16 %v60, %v59
  %v71 = vpack.c.b16 %v62, %v61
  %v72 = vpack.c.b16 %v64, %v63
  %v75 = vunpack.c.l.b16 %v31
  %v76 = vunpack.c.l.b16 %v32
  %v77 = vpack.c.b16 %v76, %v75
  %vm79 = vcmask 130048
  %v81 = vsel %vm79, %v65, 0
  %v84 = vsel %vm79, %v66, 0
  %v87 = vsel %vm79, %v67, 0
  %v90 = vsel %vm79, %v68, 0
  %v93 = vsel %vm79, %v69, 0
  %v96 = vsel %vm79, %v70, 0
  %v99 = vsel %vm79, %v71, 0
  %v102 = vsel %vm79, %v72, 0
  %104 = vmatprep.subr.bf16.mxu0 0
  %105 = vmatpush1.bf16.msra.mxu0 %v77
  %106 = vmatprep.subr.bf16.mxu0 0
  %107 = vmatpush1.bf16.msra.mxu0 0
  %108 = vmatprep.subr.bf16.mxu0 0
  %109 = vmatpush1.bf16.msra.mxu0 0
  %110 = vmatprep.subr.bf16.mxu0 0
  %111 = vmatpush1.bf16.msra.mxu0 0
  %112 = vmatprep.subr.bf16.mxu0 0
  %113 = vmatpush1.bf16.msra.mxu0 0
  %114 = vmatprep.subr.bf16.mxu0 0
  %115 = vmatpush1.bf16.msra.mxu0 0
  %116 = vmatprep.subr.bf16.mxu0 0
  %117 = vmatpush1.bf16.msra.mxu0 0
  %118 = vmatprep.subr.bf16.mxu0 0
  %119 = vmatpush1.bf16.msra.mxu0 0
  %120 = vmatprep.subr.bf16.mxu0 0
  %121 = vmatpush1.bf16.msra.mxu0 0
  %122 = vmatprep.subr.bf16.mxu0 0
  %123 = vmatpush1.bf16.msra.mxu0 0
  %124 = vmatprep.subr.bf16.mxu0 0
  %125 = vmatpush1.bf16.msra.mxu0 0
  %126 = vmatprep.subr.bf16.mxu0 0
  %127 = vmatpush1.bf16.msra.mxu0 0
  %128 = vmatprep.subr.bf16.mxu0 0
  %129 = vmatpush1.bf16.msra.mxu0 0
  %130 = vmatprep.subr.bf16.mxu0 0
  %131 = vmatpush1.bf16.msra.mxu0 0
  %132 = vmatprep.subr.bf16.mxu0 0
  %133 = vmatpush1.bf16.msra.mxu0 0
  %134 = vmatprep.subr.bf16.mxu0 0
  %135 = vmatpush1.bf16.msra.mxu0 0
  %136 = vmatprep.mubr.bf16.mxu0 0
  %137 = vmatmul.mubr.bf16.gmra.mrb[0].mxu0 %v81
  %v138 = vpop.f32.mrb[0].mxu0
  %v139 = vadd.f32 0.0, %v138
  %v140 = vpop.f32.mrb[0].mxu0
  %v141 = vpop.f32.mrb[0].mxu0
  %v142 = vadd.f32 0.0, %v141
  %v143 = vpop.f32.mrb[0].mxu0
  %144 = vmatprep.mubr.bf16.mxu0 0
  %145 = vmatmul.mubr.bf16.gmra.mrb[0].mxu0 %v84
  %v146 = vpop.f32.mrb[0].mxu0
  %v147 = vadd.f32 0.0, %v146
  %v148 = vpop.f32.mrb[0].mxu0
  %v149 = vpop.f32.mrb[0].mxu0
  %v150 = vadd.f32 0.0, %v149
  %v151 = vpop.f32.mrb[0].mxu0
  %152 = vmatprep.mubr.bf16.mxu0 0
  %153 = vmatmul.mubr.bf16.gmra.mrb[0].mxu0 %v87
  %v154 = vpop.f32.mrb[0].mxu0
  %v155 = vadd.f32 0.0, %v154
  %v156 = vpop.f32.mrb[0].mxu0
  %v157 = vpop.f32.mrb[0].mxu0
  %v158 = vadd.f32 0.0, %v157
  %v159 = vpop.f32.mrb[0].mxu0
  %160 = vmatprep.mubr.bf16.mxu0 0
  %161 = vmatmul.mubr.bf16.gmra.mrb[0].mxu0 %v90
  %v162 = vpop.f32.mrb[0].mxu0
  %v163 = vadd.f32 0.0, %v162
  %v164 = vpop.f32.mrb[0].mxu0
  %v165 = vpop.f32.mrb[0].mxu0
  %v166 = vadd.f32 0.0, %v165
  %v167 = vpop.f32.mrb[0].mxu0
  %168 = vmatprep.mubr.bf16.mxu0 0
  %169 = vmatmul.mubr.bf16.gmra.mrb[0].mxu0 %v93
  %v170 = vpop.f32.mrb[0].mxu0
  %v171 = vadd.f32 0.0, %v170
  %v172 = vpop.f32.mrb[0].mxu0
  %v173 = vpop.f32.mrb[0].mxu0
  %v174 = vadd.f32 0.0, %v173
  %v175 = vpop.f32.mrb[0].mxu0
  %176 = vmatprep.mubr.bf16.mxu0 0
  %177 = vmatmul.mubr.bf16.gmra.mrb[0].mxu0 %v96
  %v178 = vpop.f32.mrb[0].mxu0
  %v179 = vadd.f32 0.0, %v178
  %v180 = vpop.f32.mrb[0].mxu0
  %v181 = vpop.f32.mrb[0].mxu0
  %v182 = vadd.f32 0.0, %v181
  %v183 = vpop.f32.mrb[0].mxu0
  %184 = vmatprep.mubr.bf16.mxu0 0
  %185 = vmatmul.mubr.bf16.gmra.mrb[0].mxu0 %v99
  %v186 = vpop.f32.mrb[0].mxu0
  %v187 = vadd.f32 0.0, %v186
  %v188 = vpop.f32.mrb[0].mxu0
  %v189 = vpop.f32.mrb[0].mxu0
  %v190 = vadd.f32 0.0, %v189
  %v191 = vpop.f32.mrb[0].mxu0
  %192 = vmatprep.mubr.bf16.mxu0 0
  %193 = vmatmul.mubr.bf16.gmra.mrb[0].mxu0 %v102
  %v194 = vpop.f32.mrb[0].mxu0
  %v195 = vadd.f32 0.0, %v194
  %v196 = vpop.f32.mrb[0].mxu0
  %v197 = vpop.f32.mrb[0].mxu0
  %v198 = vadd.f32 0.0, %v197
  %v199 = vpop.f32.mrb[0].mxu0
  %200 = vdwg.mxu0
  %v201 = vld [vmem:[%s2] sm:$0x1]
  %v203 = vlaneseq
  %v204 = vshrl.u32 %v203, 7
  %v205 = vsub.s32 0, %v204
  %v206 = vrot.slane %v201, %v205
  %v208 = vadd.f32 %v139, %v206
  %v209 = vadd.f32 %v142, %v206
  %v210 = vadd.f32 %v147, %v206
  %v211 = vadd.f32 %v150, %v206
  %v212 = vadd.f32 %v155, %v206
  %v213 = vadd.f32 %v158, %v206
  %v214 = vadd.f32 %v163, %v206
  %v215 = vadd.f32 %v166, %v206
  %v216 = vadd.f32 %v171, %v206
  %v217 = vadd.f32 %v174, %v206
  %v218 = vadd.f32 %v179, %v206
  %v219 = vadd.f32 %v182, %v206
  %v220 = vadd.f32 %v187, %v206
  %v221 = vadd.f32 %v190, %v206
  %v222 = vadd.f32 %v195, %v206
  %v223 = vadd.f32 %v198, %v206
  %vm224 = vcmask 261120
  %225 = vst.msk [vmem:[%s3] sm:$0xff] %vm224, %v208
  %226 = vst.msk [vmem:[%s3 + $0x8] sm:$0xff] %vm224, %v209
  %227 = vst.msk [vmem:[%s3 + $0x10] sm:$0xff] %vm224, %v210
  %228 = vst.msk [vmem:[%s3 + $0x18] sm:$0xff] %vm224, %v211
  %229 = vst.msk [vmem:[%s3 + $0x20] sm:$0xff] %vm224, %v212
  %230 = vst.msk [vmem:[%s3 + $0x28] sm:$0xff] %vm224, %v213
  %231 = vst.msk [vmem:[%s3 + $0x30] sm:$0xff] %vm224, %v214
  %232 = vst.msk [vmem:[%s3 + $0x38] sm:$0xff] %vm224, %v215
  %233 = vst.msk [vmem:[%s3 + $0x40] sm:$0xff] %vm224, %v216
  %234 = vst.msk [vmem:[%s3 + $0x48] sm:$0xff] %vm224, %v217
  %235 = vst.msk [vmem:[%s3 + $0x50] sm:$0xff] %vm224, %v218
  %236 = vst.msk [vmem:[%s3 + $0x58] sm:$0xff] %vm224, %v219
  %237 = vst.msk [vmem:[%s3 + $0x60] sm:$0xff] %vm224, %v220
  %238 = vst.msk [vmem:[%s3 + $0x68] sm:$0xff] %vm224, %v221
  %239 = vst.msk [vmem:[%s3 + $0x70] sm:$0xff] %vm224, %v222
  %240 = vst.msk [vmem:[%s3 + $0x78] sm:$0xff] %vm224, %v223
  // Predicated region
  $region14: #{tpu_custom_call.1} parent=0 // pred_check
    _
  $region15: #{tpu_custom_call.1} parent=0 // pred_check_branch
    %242 = sbr.rel (0) target = $region17
  $region16: #{tpu_custom_call.1} parent=0 // pred_region
    _
  $region17: #{tpu_custom_call.1} parent=0 // pred_fallthru
    _
  // Predicated region
  $region18: #{tpu_custom_call.1} parent=0 // pred_check
    _
  $region19: #{tpu_custom_call.1} parent=0 // pred_check_branch
    %244 = sbr.rel (0) target = $region21
  $region20: #{tpu_custom_call.1} parent=0 // pred_region
    _
  $region21: #{tpu_custom_call.1} parent=0 // pred_fallthru
    _

</llo_original>
